<compile_context>
chip_gen: v7x
topology: tpu7x:2x2x1
jax: 0.10.0
libtpu: 0.0.40
codegen_flags: <defaults>
</compile_context>

<pallas_src>
import functools

import jax
import jax.numpy as jnp
from jax import lax
from jax.experimental import pallas as pl
from jax.experimental.pallas import tpu as pltpu


def _round_up(x, m):
    return ((x + m - 1) // m) * m


def _geo_frob_kernel(m1_ref, m2_ref, cos_ref, frob_ref, *, eps, true_b, r_blk):
    """m1_ref, m2_ref: (9, r_blk, 128) f32; cos_ref: (r_blk, 128); frob_ref: (8, 128)."""
    g = pl.program_id(0)

    # Hoist all 18 element loads once; each is a dense (r_blk, 128) tile.
    a = [m1_ref[e] for e in range(9)]
    b = [m2_ref[e] for e in range(9)]

    # Unrolled batched 3x3 matmul: m[i,k] = sum_j m1[i,j] * m2[k,j]   (m1 @ m2^T)
    m = [[None] * 3 for _ in range(3)]
    for i in range(3):
        for k in range(3):
            m[i][k] = (a[i * 3 + 0] * b[k * 3 + 0]
                       + a[i * 3 + 1] * b[k * 3 + 1]
                       + a[i * 3 + 2] * b[k * 3 + 2])

    # Geodesic part: clamped cosine of the rotation angle (acos applied outside).
    cos = (m[0][0] + m[1][1] + m[2][2] - 1.0) * 0.5
    cos = jnp.clip(cos, -1.0 + eps, 1.0 - eps)
    cos_ref[...] = cos

    # Frobenius part: || m - I ||_F per batch.
    fsum = jnp.zeros_like(cos)
    for i in range(3):
        for k in range(3):
            d = m[i][k] - (1.0 if i == k else 0.0)
            fsum = fsum + d * d
    frob = jnp.sqrt(fsum)

    # Mask out padded batch entries so they do not pollute the mean.
    row = lax.broadcasted_iota(jnp.int32, (r_blk, 128), 0)
    lane = lax.broadcasted_iota(jnp.int32, (r_blk, 128), 1)
    batch_idx = (g * r_blk + row) * 128 + lane
    frob = jnp.where(batch_idx < true_b, frob, 0.0)

    # Sublane-reduce to one (8, 128) partial-sum block per tile.
    part = frob[0:8, :]
    for s in range(8, r_blk, 8):
        part = part + frob[s:s + 8, :]
    frob_ref[...] = part


def _to_elem_major(m, b_pad):
    """(B, 3, 3) -> (9, b_pad//128, 128) float32, element-major, zero-padded."""
    B = m.shape[0]
    x = m.reshape(B, 9).astype(jnp.float32)
    x = jnp.pad(x, ((0, b_pad - B), (0, 0)))
    return jnp.transpose(x, (1, 0)).reshape(9, b_pad // 128, 128)


def geodesic_and_frobenius_loss(m1, m2, *, geodesic_weight=1.0,
                                frobenius_weight=1.0, eps=1e-7):
    """m1, m2: (B, 3, 3) arrays (same convention as the PyTorch module)."""
    B = m1.shape[0]
    nrows = pl.cdiv(B, 128)
    r_blk = min(64, _round_up(max(nrows, 1), 8))   # rows of 128 lanes per grid step
    nrows_p = _round_up(nrows, r_blk)
    b_pad = nrows_p * 128
    n_tiles = nrows_p // r_blk

    m1_t = _to_elem_major(m1, b_pad)   # (9, nrows_p, 128)
    m2_t = _to_elem_major(m2, b_pad)

    cos_out, frob_part = pl.pallas_call(
        functools.partial(_geo_frob_kernel, eps=eps, true_b=B, r_blk=r_blk),
        grid=(n_tiles,),
        out_shape=(
            jax.ShapeDtypeStruct((nrows_p, 128), jnp.float32),   # per-batch cos
            jax.ShapeDtypeStruct((n_tiles * 8, 128), jnp.float32),  # frob partial sums
        ),
        in_specs=[
            pl.BlockSpec((9, r_blk, 128), lambda g: (0, g, 0)),
            pl.BlockSpec((9, r_blk, 128), lambda g: (0, g, 0)),
        ],
        out_specs=(
            pl.BlockSpec((r_blk, 128), lambda g: (g, 0)),
            pl.BlockSpec((8, 128), lambda g: (g, 0)),
        ),
        compiler_params=pltpu.CompilerParams(
            dimension_semantics=("parallel",)),
    )(m1_t, m2_t)

    cos = cos_out.reshape(-1)[:B]          # drop padded batches
    theta = jnp.arccos(cos)                # tiny epilogue on B scalars
    geodesic_loss = jnp.mean(theta)
    frobenius_loss = jnp.sum(frob_part) / B
    return geodesic_weight * geodesic_loss + frobenius_weight * frobenius_loss


def _reference_loss(m1, m2, geodesic_weight=1.0, frobenius_weight=1.0, eps=1e-7):
    """Pure-JAX reference matching the PyTorch forward exactly."""
    m = jnp.einsum('bij,bkj->bik', m1.astype(jnp.float32), m2.astype(jnp.float32))
    cos = (m[:, 0, 0] + m[:, 1, 1] + m[:, 2, 2] - 1.0) / 2.0
    theta = jnp.arccos(jnp.clip(cos, -1.0 + eps, 1.0 - eps))
    geodesic_loss = jnp.mean(theta)
    eye = jnp.eye(3, dtype=m.dtype)
    frobenius_loss = jnp.mean(jnp.sqrt(jnp.sum((m - eye[None]) ** 2, axis=(1, 2))))
    return geodesic_weight * geodesic_loss + frobenius_weight * frobenius_loss


if __name__ == "__main__":
    # Deterministic "module parameters" (from __init__ defaults).
    geodesic_weight = 1.0
    frobenius_weight = 1.0
    eps = 1e-7

    key = jax.random.PRNGKey(0)
    k1, k2 = jax.random.split(key)
    B = 8
    m1 = jax.random.normal(k1, (B, 3, 3), dtype=jnp.float32)
    m2 = jax.random.normal(k2, (B, 3, 3), dtype=jnp.float32)

    loss = geodesic_and_frobenius_loss(
        m1, m2,
        geodesic_weight=geodesic_weight,
        frobenius_weight=frobenius_weight,
        eps=eps,
    )
    loss = jax.block_until_ready(loss)

    ref = jax.block_until_ready(
        _reference_loss(m1, m2, geodesic_weight, frobenius_weight, eps))

    assert jnp.allclose(loss, ref, rtol=1e-5, atol=1e-5), (loss, ref)
    print("KERNEL_OK")
</pallas_src>

<mosaic_0001>
module attributes {stable_mosaic.version = 11 : i64} {
  func.func @_geo_frob_kernel(%arg0: i32, %arg1: memref<9x8x128xf32, #tpu.memory_space<vmem>>, %arg2: memref<9x8x128xf32, #tpu.memory_space<vmem>>, %arg3: memref<8x128xf32, #tpu.memory_space<vmem>>, %arg4: memref<8x128xf32, #tpu.memory_space<vmem>>) attributes {dimension_semantics = [#tpu.dimension_semantics<parallel>], iteration_bounds = array<i64: 1>, scalar_prefetch = 0 : i64, scratch_operands = 0 : i64, tpu.core_type = #tpu.core_type<tc>, window_params = [{transform_indices = @transform_0, window_bounds = array<i64: 9, 8, 128>}, {transform_indices = @transform_1, window_bounds = array<i64: 9, 8, 128>}, {transform_indices = @transform_2, window_bounds = array<i64: 8, 128>}, {transform_indices = @transform_3, window_bounds = array<i64: 8, 128>}]} {
    %c0 = arith.constant 0 : index
    %c0_0 = arith.constant 0 : index
    %c0_1 = arith.constant 0 : index
    %0 = vector.load %arg1[%c0, %c0_0, %c0_1] : memref<9x8x128xf32, #tpu.memory_space<vmem>>, vector<1x8x128xf32>
    %1 = vector.shape_cast %0 : vector<1x8x128xf32> to vector<8x128xf32>
    %c1 = arith.constant 1 : index
    %c0_2 = arith.constant 0 : index
    %c0_3 = arith.constant 0 : index
    %2 = vector.load %arg1[%c1, %c0_2, %c0_3] : memref<9x8x128xf32, #tpu.memory_space<vmem>>, vector<1x8x128xf32>
    %3 = vector.shape_cast %2 : vector<1x8x128xf32> to vector<8x128xf32>
    %c2 = arith.constant 2 : index
    %c0_4 = arith.constant 0 : index
    %c0_5 = arith.constant 0 : index
    %4 = vector.load %arg1[%c2, %c0_4, %c0_5] : memref<9x8x128xf32, #tpu.memory_space<vmem>>, vector<1x8x128xf32>
    %5 = vector.shape_cast %4 : vector<1x8x128xf32> to vector<8x128xf32>
    %c3 = arith.constant 3 : index
    %c0_6 = arith.constant 0 : index
    %c0_7 = arith.constant 0 : index
    %6 = vector.load %arg1[%c3, %c0_6, %c0_7] : memref<9x8x128xf32, #tpu.memory_space<vmem>>, vector<1x8x128xf32>
    %7 = vector.shape_cast %6 : vector<1x8x128xf32> to vector<8x128xf32>
    %c4 = arith.constant 4 : index
    %c0_8 = arith.constant 0 : index
    %c0_9 = arith.constant 0 : index
    %8 = vector.load %arg1[%c4, %c0_8, %c0_9] : memref<9x8x128xf32, #tpu.memory_space<vmem>>, vector<1x8x128xf32>
    %9 = vector.shape_cast %8 : vector<1x8x128xf32> to vector<8x128xf32>
    %c5 = arith.constant 5 : index
    %c0_10 = arith.constant 0 : index
    %c0_11 = arith.constant 0 : index
    %10 = vector.load %arg1[%c5, %c0_10, %c0_11] : memref<9x8x128xf32, #tpu.memory_space<vmem>>, vector<1x8x128xf32>
    %11 = vector.shape_cast %10 : vector<1x8x128xf32> to vector<8x128xf32>
    %c6 = arith.constant 6 : index
    %c0_12 = arith.constant 0 : index
    %c0_13 = arith.constant 0 : index
    %12 = vector.load %arg1[%c6, %c0_12, %c0_13] : memref<9x8x128xf32, #tpu.memory_space<vmem>>, vector<1x8x128xf32>
    %13 = vector.shape_cast %12 : vector<1x8x128xf32> to vector<8x128xf32>
    %c7 = arith.constant 7 : index
    %c0_14 = arith.constant 0 : index
    %c0_15 = arith.constant 0 : index
    %14 = vector.load %arg1[%c7, %c0_14, %c0_15] : memref<9x8x128xf32, #tpu.memory_space<vmem>>, vector<1x8x128xf32>
    %15 = vector.shape_cast %14 : vector<1x8x128xf32> to vector<8x128xf32>
    %c8 = arith.constant 8 : index
    %c0_16 = arith.constant 0 : index
    %c0_17 = arith.constant 0 : index
    %16 = vector.load %arg1[%c8, %c0_16, %c0_17] : memref<9x8x128xf32, #tpu.memory_space<vmem>>, vector<1x8x128xf32>
    %17 = vector.shape_cast %16 : vector<1x8x128xf32> to vector<8x128xf32>
    %c0_18 = arith.constant 0 : index
    %c0_19 = arith.constant 0 : index
    %c0_20 = arith.constant 0 : index
    %18 = vector.load %arg2[%c0_18, %c0_19, %c0_20] : memref<9x8x128xf32, #tpu.memory_space<vmem>>, vector<1x8x128xf32>
    %19 = vector.shape_cast %18 : vector<1x8x128xf32> to vector<8x128xf32>
    %c1_21 = arith.constant 1 : index
    %c0_22 = arith.constant 0 : index
    %c0_23 = arith.constant 0 : index
    %20 = vector.load %arg2[%c1_21, %c0_22, %c0_23] : memref<9x8x128xf32, #tpu.memory_space<vmem>>, vector<1x8x128xf32>
    %21 = vector.shape_cast %20 : vector<1x8x128xf32> to vector<8x128xf32>
    %c2_24 = arith.constant 2 : index
    %c0_25 = arith.constant 0 : index
    %c0_26 = arith.constant 0 : index
    %22 = vector.load %arg2[%c2_24, %c0_25, %c0_26] : memref<9x8x128xf32, #tpu.memory_space<vmem>>, vector<1x8x128xf32>
    %23 = vector.shape_cast %22 : vector<1x8x128xf32> to vector<8x128xf32>
    %c3_27 = arith.constant 3 : index
    %c0_28 = arith.constant 0 : index
    %c0_29 = arith.constant 0 : index
    %24 = vector.load %arg2[%c3_27, %c0_28, %c0_29] : memref<9x8x128xf32, #tpu.memory_space<vmem>>, vector<1x8x128xf32>
    %25 = vector.shape_cast %24 : vector<1x8x128xf32> to vector<8x128xf32>
    %c4_30 = arith.constant 4 : index
    %c0_31 = arith.constant 0 : index
    %c0_32 = arith.constant 0 : index
    %26 = vector.load %arg2[%c4_30, %c0_31, %c0_32] : memref<9x8x128xf32, #tpu.memory_space<vmem>>, vector<1x8x128xf32>
    %27 = vector.shape_cast %26 : vector<1x8x128xf32> to vector<8x128xf32>
    %c5_33 = arith.constant 5 : index
    %c0_34 = arith.constant 0 : index
    %c0_35 = arith.constant 0 : index
    %28 = vector.load %arg2[%c5_33, %c0_34, %c0_35] : memref<9x8x128xf32, #tpu.memory_space<vmem>>, vector<1x8x128xf32>
    %29 = vector.shape_cast %28 : vector<1x8x128xf32> to vector<8x128xf32>
    %c6_36 = arith.constant 6 : index
    %c0_37 = arith.constant 0 : index
    %c0_38 = arith.constant 0 : index
    %30 = vector.load %arg2[%c6_36, %c0_37, %c0_38] : memref<9x8x128xf32, #tpu.memory_space<vmem>>, vector<1x8x128xf32>
    %31 = vector.shape_cast %30 : vector<1x8x128xf32> to vector<8x128xf32>
    %c7_39 = arith.constant 7 : index
    %c0_40 = arith.constant 0 : index
    %c0_41 = arith.constant 0 : index
    %32 = vector.load %arg2[%c7_39, %c0_40, %c0_41] : memref<9x8x128xf32, #tpu.memory_space<vmem>>, vector<1x8x128xf32>
    %33 = vector.shape_cast %32 : vector<1x8x128xf32> to vector<8x128xf32>
    %c8_42 = arith.constant 8 : index
    %c0_43 = arith.constant 0 : index
    %c0_44 = arith.constant 0 : index
    %34 = vector.load %arg2[%c8_42, %c0_43, %c0_44] : memref<9x8x128xf32, #tpu.memory_space<vmem>>, vector<1x8x128xf32>
    %35 = vector.shape_cast %34 : vector<1x8x128xf32> to vector<8x128xf32>
    %36 = arith.mulf %1, %19 : vector<8x128xf32>
    %37 = arith.mulf %3, %21 : vector<8x128xf32>
    %38 = arith.addf %36, %37 : vector<8x128xf32>
    %39 = arith.mulf %5, %23 : vector<8x128xf32>
    %40 = arith.addf %38, %39 : vector<8x128xf32>
    %41 = arith.mulf %1, %25 : vector<8x128xf32>
    %42 = arith.mulf %3, %27 : vector<8x128xf32>
    %43 = arith.addf %41, %42 : vector<8x128xf32>
    %44 = arith.mulf %5, %29 : vector<8x128xf32>
    %45 = arith.addf %43, %44 : vector<8x128xf32>
    %46 = arith.mulf %1, %31 : vector<8x128xf32>
    %47 = arith.mulf %3, %33 : vector<8x128xf32>
    %48 = arith.addf %46, %47 : vector<8x128xf32>
    %49 = arith.mulf %5, %35 : vector<8x128xf32>
    %50 = arith.addf %48, %49 : vector<8x128xf32>
    %51 = arith.mulf %7, %19 : vector<8x128xf32>
    %52 = arith.mulf %9, %21 : vector<8x128xf32>
    %53 = arith.addf %51, %52 : vector<8x128xf32>
    %54 = arith.mulf %11, %23 : vector<8x128xf32>
    %55 = arith.addf %53, %54 : vector<8x128xf32>
    %56 = arith.mulf %7, %25 : vector<8x128xf32>
    %57 = arith.mulf %9, %27 : vector<8x128xf32>
    %58 = arith.addf %56, %57 : vector<8x128xf32>
    %59 = arith.mulf %11, %29 : vector<8x128xf32>
    %60 = arith.addf %58, %59 : vector<8x128xf32>
    %61 = arith.mulf %7, %31 : vector<8x128xf32>
    %62 = arith.mulf %9, %33 : vector<8x128xf32>
    %63 = arith.addf %61, %62 : vector<8x128xf32>
    %64 = arith.mulf %11, %35 : vector<8x128xf32>
    %65 = arith.addf %63, %64 : vector<8x128xf32>
    %66 = arith.mulf %13, %19 : vector<8x128xf32>
    %67 = arith.mulf %15, %21 : vector<8x128xf32>
    %68 = arith.addf %66, %67 : vector<8x128xf32>
    %69 = arith.mulf %17, %23 : vector<8x128xf32>
    %70 = arith.addf %68, %69 : vector<8x128xf32>
    %71 = arith.mulf %13, %25 : vector<8x128xf32>
    %72 = arith.mulf %15, %27 : vector<8x128xf32>
    %73 = arith.addf %71, %72 : vector<8x128xf32>
    %74 = arith.mulf %17, %29 : vector<8x128xf32>
    %75 = arith.addf %73, %74 : vector<8x128xf32>
    %76 = arith.mulf %13, %31 : vector<8x128xf32>
    %77 = arith.mulf %15, %33 : vector<8x128xf32>
    %78 = arith.addf %76, %77 : vector<8x128xf32>
    %79 = arith.mulf %17, %35 : vector<8x128xf32>
    %80 = arith.addf %78, %79 : vector<8x128xf32>
    %81 = arith.addf %40, %60 : vector<8x128xf32>
    %82 = arith.addf %81, %80 : vector<8x128xf32>
    %cst = arith.constant 1.000000e+00 : f32
    %83 = vector.broadcast %cst : f32 to vector<8x128xf32>
    %84 = arith.subf %82, %83 : vector<8x128xf32>
    %cst_45 = arith.constant 5.000000e-01 : f32
    %85 = vector.broadcast %cst_45 : f32 to vector<8x128xf32>
    %86 = arith.mulf %84, %85 : vector<8x128xf32>
    %cst_46 = arith.constant -0.99999988 : f32
    %cst_47 = arith.constant 0.99999988 : f32
    %87 = vector.broadcast %cst_46 : f32 to vector<8x128xf32>
    %88 = arith.maximumf %87, %86 : vector<8x128xf32>
    %89 = vector.broadcast %cst_47 : f32 to vector<8x128xf32>
    %90 = arith.minimumf %89, %88 : vector<8x128xf32>
    %c0_48 = arith.constant 0 : index
    %c0_49 = arith.constant 0 : index
    %91 = vector.load %arg3[%c0_48, %c0_49] : memref<8x128xf32, #tpu.memory_space<vmem>>, vector<8x128xf32>
    tpu.vector_store %arg3[%c0_48, %c0_49], %90 {strides = array<i32>} : memref<8x128xf32, #tpu.memory_space<vmem>>, vector<8x128xf32>,
    %cst_50 = arith.constant 0.000000e+00 : f32
    %92 = vector.broadcast %cst_50 : f32 to vector<8x128xf32>
    %cst_51 = arith.constant 1.000000e+00 : f32
    %93 = vector.broadcast %cst_51 : f32 to vector<8x128xf32>
    %94 = arith.subf %40, %93 : vector<8x128xf32>
    %95 = arith.mulf %94, %94 : vector<8x128xf32>
    %96 = arith.addf %92, %95 : vector<8x128xf32>
    %cst_52 = arith.constant 0.000000e+00 : f32
    %97 = vector.broadcast %cst_52 : f32 to vector<8x128xf32>
    %98 = arith.subf %45, %97 : vector<8x128xf32>
    %99 = arith.mulf %98, %98 : vector<8x128xf32>
    %100 = arith.addf %96, %99 : vector<8x128xf32>
    %cst_53 = arith.constant 0.000000e+00 : f32
    %101 = vector.broadcast %cst_53 : f32 to vector<8x128xf32>
    %102 = arith.subf %50, %101 : vector<8x128xf32>
    %103 = arith.mulf %102, %102 : vector<8x128xf32>
    %104 = arith.addf %100, %103 : vector<8x128xf32>
    %cst_54 = arith.constant 0.000000e+00 : f32
    %105 = vector.broadcast %cst_54 : f32 to vector<8x128xf32>
    %106 = arith.subf %55, %105 : vector<8x128xf32>
    %107 = arith.mulf %106, %106 : vector<8x128xf32>
    %108 = arith.addf %104, %107 : vector<8x128xf32>
    %cst_55 = arith.constant 1.000000e+00 : f32
    %109 = vector.broadcast %cst_55 : f32 to vector<8x128xf32>
    %110 = arith.subf %60, %109 : vector<8x128xf32>
    %111 = arith.mulf %110, %110 : vector<8x128xf32>
    %112 = arith.addf %108, %111 : vector<8x128xf32>
    %cst_56 = arith.constant 0.000000e+00 : f32
    %113 = vector.broadcast %cst_56 : f32 to vector<8x128xf32>
    %114 = arith.subf %65, %113 : vector<8x128xf32>
    %115 = arith.mulf %114, %114 : vector<8x128xf32>
    %116 = arith.addf %112, %115 : vector<8x128xf32>
    %cst_57 = arith.constant 0.000000e+00 : f32
    %117 = vector.broadcast %cst_57 : f32 to vector<8x128xf32>
    %118 = arith.subf %70, %117 : vector<8x128xf32>
    %119 = arith.mulf %118, %118 : vector<8x128xf32>
    %120 = arith.addf %116, %119 : vector<8x128xf32>
    %cst_58 = arith.constant 0.000000e+00 : f32
    %121 = vector.broadcast %cst_58 : f32 to vector<8x128xf32>
    %122 = arith.subf %75, %121 : vector<8x128xf32>
    %123 = arith.mulf %122, %122 : vector<8x128xf32>
    %124 = arith.addf %120, %123 : vector<8x128xf32>
    %cst_59 = arith.constant 1.000000e+00 : f32
    %125 = vector.broadcast %cst_59 : f32 to vector<8x128xf32>
    %126 = arith.subf %80, %125 : vector<8x128xf32>
    %127 = arith.mulf %126, %126 : vector<8x128xf32>
    %128 = arith.addf %124, %127 : vector<8x128xf32>
    %129 = math.sqrt %128 : vector<8x128xf32>
    %130 = tpu.iota {dimensions = array<i32: 0>} : vector<8x128xi32>
    %131 = tpu.iota {dimensions = array<i32: 1>} : vector<8x128xi32>
    %c8_i32 = arith.constant 8 : i32
    %132 = arith.muli %arg0, %c8_i32 : i32
    %133 = vector.broadcast %132 : i32 to vector<8x128xi32>
    %134 = arith.addi %133, %130 : vector<8x128xi32>
    %c128_i32 = arith.constant 128 : i32
    %135 = vector.broadcast %c128_i32 : i32 to vector<8x128xi32>
    %136 = arith.muli %134, %135 : vector<8x128xi32>
    %137 = arith.addi %136, %131 : vector<8x128xi32>
    %c8_i32_60 = arith.constant 8 : i32
    %138 = vector.broadcast %c8_i32_60 : i32 to vector<8x128xi32>
    %139 = arith.cmpi slt, %137, %138 : vector<8x128xi32>
    %cst_61 = arith.constant 0.000000e+00 : f32
    %140 = vector.broadcast %cst_61 : f32 to vector<8x128xf32>
    %141 = arith.select %139, %129, %140 : vector<8x128xi1>, vector<8x128xf32>
    %c0_62 = arith.constant 0 : index
    %c0_63 = arith.constant 0 : index
    %142 = vector.load %arg4[%c0_62, %c0_63] : memref<8x128xf32, #tpu.memory_space<vmem>>, vector<8x128xf32>
    tpu.vector_store %arg4[%c0_62, %c0_63], %141 {strides = array<i32>} : memref<8x128xf32, #tpu.memory_space<vmem>>, vector<8x128xf32>,
    return
  }
  func.func @transform_0(%arg0: i32) -> (i32, i32, i32) {
    %c0_i32 = arith.constant 0 : i32
    %c0_i32_0 = arith.constant 0 : i32
    %c0_i32_1 = arith.constant 0 : i32
    return %c0_i32, %arg0, %c0_i32_0 : i32, i32, i32
  }
  func.func @transform_1(%arg0: i32) -> (i32, i32, i32) {
    %c0_i32 = arith.constant 0 : i32
    %c0_i32_0 = arith.constant 0 : i32
    %c0_i32_1 = arith.constant 0 : i32
    return %c0_i32, %arg0, %c0_i32_0 : i32, i32, i32
  }
  func.func @transform_2(%arg0: i32) -> (i32, i32) {
    %c0_i32 = arith.constant 0 : i32
    %c0_i32_0 = arith.constant 0 : i32
    return %arg0, %c0_i32 : i32, i32
  }
  func.func @transform_3(%arg0: i32) -> (i32, i32) {
    %c0_i32 = arith.constant 0 : i32
    %c0_i32_0 = arith.constant 0 : i32
    return %arg0, %c0_i32 : i32, i32
  }
}

</mosaic_0001>

<llo_original>
// kernel: tpu_custom_call.1
$region0: #{tpu_custom_call.1}
  #allocation0 [shape = 'u32[]', space=smem, size = 0x4, offset = 0x4, fixed_abs, tag = 'smem constant byte address 0x4 - core index']
  #allocation1 [shape = 'u32[144,128]{1,0:T(1,128)}', space=vmem, size = 0x12000, scoped, tag = 'internal scratch']
  %s0 = inlined_call_operand.hbm [shape: f32[9,8,128], index: 0, kind: input, shape index: {}]
  %s1 = inlined_call_operand.hbm [shape: f32[9,8,128], index: 1, kind: input, shape index: {}]
  %s2 = inlined_call_operand.hbm [shape: f32[8,128], index: 2, kind: output, shape index: {0}]
  %s3 = inlined_call_operand.hbm [shape: f32[8,128], index: 3, kind: output, shape index: {1}]
  %4 = xla_tuple %s2, %s3
  %s5 = sld [smem:[#allocation0]]
  $region34: #{tpu_custom_call.1} parent=0
    _
  %s7 = ssub.s32 1, %s5
  %s8 = scalar_select 0, %s7, %s5
  $region1: #{tpu_custom_call.1} parent=0
    #allocation2 [shape = 'u8[36864]{0}', space=vmem, size = 0x9000, scoped, tag = 'input window, operand 0, single buffered']
    #allocation3 [shape = 's32[1]{0}', space=sflag, size = 0x4, scoped, tag = 'scoped memory for tpu_custom_call.1']
    #allocation4 [shape = 's32[1]{0}', space=sflag, size = 0x4, scoped, tag = 'scoped memory for tpu_custom_call.1']
    #allocation5 [shape = 'u8[36864]{0}', space=vmem, size = 0x9000, scoped, tag = 'input window, operand 1, single buffered']
    #allocation6 [shape = 's32[1]{0}', space=sflag, size = 0x4, scoped, tag = 'scoped memory for tpu_custom_call.1']
    #allocation7 [shape = 'u8[4096]{0}', space=vmem, size = 0x1000, scoped, tag = 'output window, operand 0, single buffered']
    #allocation8 [shape = 'u8[4096]{0}', space=vmem, size = 0x1000, scoped, tag = 'output window, operand 1, single buffered']
    #allocation9 [shape = 's32[1]{0}', space=sflag, size = 0x4, scoped, tag = 'scoped memory for tpu_custom_call.1']
    %9 = vsyncpa [#allocation3], 0
    %10 = vsyncpa [#allocation6], 0
    %11 = vsyncpa [#allocation4], 0
    %12 = vsyncpa [#allocation9], 0
    // Predicated region
    $region2: #{tpu_custom_call.1} parent=1 // pred_check
      _
    $region3: #{tpu_custom_call.1} parent=1 // pred_check_branch
      %14 = sbr.rel (0) target = $region5
    $region4: #{tpu_custom_call.1} parent=1 // pred_region
      %s16 = ssub.s32 1152, 1152
      %17 = vsyncadd [#allocation3], %s16
      %s18 = sshll.u32 [#allocation2], 4
      %s19 = int_to_ptr.vmem [resolvable:$true] %s18
      %24 = dma.hbm_to_vmem [thread:$0]  %s0, 1152, %s19, [#allocation3], 128, 128, 8
    $region5: #{tpu_custom_call.1} parent=1 // pred_fallthru
      _
    // Predicated region
    $region6: #{tpu_custom_call.1} parent=1 // pred_check
      _
    $region7: #{tpu_custom_call.1} parent=1 // pred_check_branch
      %26 = sbr.rel (0) target = $region9
    $region8: #{tpu_custom_call.1} parent=1 // pred_region
      %s28 = ssub.s32 1152, 1152
      %29 = vsyncadd [#allocation6], %s28
      %s30 = sshll.u32 [#allocation5], 4
      %s31 = int_to_ptr.vmem [resolvable:$true] %s30
      %36 = dma.hbm_to_vmem [thread:$0]  %s1, 1152, %s31, [#allocation6], 128, 128, 8
    $region9: #{tpu_custom_call.1} parent=1 // pred_fallthru
      _
    // Predicated region
    $region10: #{tpu_custom_call.1} parent=1 // pred_check
      _
    $region11: #{tpu_custom_call.1} parent=1 // pred_check_branch
      %38 = sbr.rel (0) target = $region13
    $region12: #{tpu_custom_call.1} parent=1 // pred_region
      %39 = dma.done [#allocation3], 1152
    $region13: #{tpu_custom_call.1} parent=1 // pred_fallthru
      _
    // Predicated region
    $region14: #{tpu_custom_call.1} parent=1 // pred_check
      _
    $region15: #{tpu_custom_call.1} parent=1 // pred_check_branch
      %41 = sbr.rel (0) target = $region17
    $region16: #{tpu_custom_call.1} parent=1 // pred_region
      %42 = dma.done [#allocation6], 1152
    $region17: #{tpu_custom_call.1} parent=1 // pred_fallthru
      _
    %v43 = vld [vmem:[#allocation2] sm:$0xff]
    %s44 = scalar_lea.vmem [#allocation2], 8
    %v45 = vld [vmem:[%s44] sm:$0xff]
    %s46 = scalar_lea.vmem [#allocation2], 16
    %v47 = vld [vmem:[%s46] sm:$0xff]
    %s48 = scalar_lea.vmem [#allocation2], 24
    %v49 = vld [vmem:[%s48] sm:$0xff]
    %s50 = scalar_lea.vmem [#allocation2], 32
    %v51 = vld [vmem:[%s50] sm:$0xff]
    %s52 = scalar_lea.vmem [#allocation2], 40
    %v53 = vld [vmem:[%s52] sm:$0xff]
    %s54 = scalar_lea.vmem [#allocation2], 48
    %v55 = vld [vmem:[%s54] sm:$0xff]
    %s56 = scalar_lea.vmem [#allocation2], 56
    %v57 = vld [vmem:[%s56] sm:$0xff]
    %s58 = scalar_lea.vmem [#allocation2], 64
    %v59 = vld [vmem:[%s58] sm:$0xff]
    %v60 = vld [vmem:[#allocation5] sm:$0xff]
    %s61 = scalar_lea.vmem [#allocation5], 8
    %v62 = vld [vmem:[%s61] sm:$0xff]
    %s63 = scalar_lea.vmem [#allocation5], 16
    %v64 = vld [vmem:[%s63] sm:$0xff]
    %s65 = scalar_lea.vmem [#allocation5], 24
    %v66 = vld [vmem:[%s65] sm:$0xff]
    %s67 = scalar_lea.vmem [#allocation5], 32
    %v68 = vld [vmem:[%s67] sm:$0xff]
    %s69 = scalar_lea.vmem [#allocation5], 40
    %v70 = vld [vmem:[%s69] sm:$0xff]
    %s71 = scalar_lea.vmem [#allocation5], 48
    %v72 = vld [vmem:[%s71] sm:$0xff]
    %s73 = scalar_lea.vmem [#allocation5], 56
    %v74 = vld [vmem:[%s73] sm:$0xff]
    %s75 = scalar_lea.vmem [#allocation5], 64
    %v76 = vld [vmem:[%s75] sm:$0xff]
    %v77 = vmul.f32 %v43, %v60
    %v78 = vmul.f32 %v45, %v62
    %v79 = vadd.f32 %v77, %v78
    %v80 = vmul.f32 %v47, %v64
    %v81 = vadd.f32 %v79, %v80
    %v82 = vmul.f32 %v43, %v66
    %v83 = vmul.f32 %v45, %v68
    %v84 = vadd.f32 %v82, %v83
    %v85 = vmul.f32 %v47, %v70
    %v86 = vadd.f32 %v84, %v85
    %v87 = vmul.f32 %v43, %v72
    %v88 = vmul.f32 %v45, %v74
    %v89 = vadd.f32 %v87, %v88
    %v90 = vmul.f32 %v47, %v76
    %v91 = vadd.f32 %v89, %v90
    %v92 = vmul.f32 %v49, %v60
    %v93 = vmul.f32 %v51, %v62
    %v94 = vadd.f32 %v92, %v93
    %v95 = vmul.f32 %v53, %v64
    %v96 = vadd.f32 %v94, %v95
    %v97 = vmul.f32 %v49, %v66
    %v98 = vmul.f32 %v51, %v68
    %v99 = vadd.f32 %v97, %v98
    %v100 = vmul.f32 %v53, %v70
    %v101 = vadd.f32 %v99, %v100
    %v102 = vmul.f32 %v49, %v72
    %v103 = vmul.f32 %v51, %v74
    %v104 = vadd.f32 %v102, %v103
    %v105 = vmul.f32 %v53, %v76
    %v106 = vadd.f32 %v104, %v105
    %v107 = vmul.f32 %v55, %v60
    %v108 = vmul.f32 %v57, %v62
    %v109 = vadd.f32 %v107, %v108
    %v110 = vmul.f32 %v59, %v64
    %v111 = vadd.f32 %v109, %v110
    %v112 = vmul.f32 %v55, %v66
    %v113 = vmul.f32 %v57, %v68
    %v114 = vadd.f32 %v112, %v113
    %v115 = vmul.f32 %v59, %v70
    %v116 = vadd.f32 %v114, %v115
    %v117 = vmul.f32 %v55, %v72
    %v118 = vmul.f32 %v57, %v74
    %v119 = vadd.f32 %v117, %v118
    %v120 = vmul.f32 %v59, %v76
    %v121 = vadd.f32 %v119, %v120
    %v122 = vadd.f32 %v81, %v101
    %v123 = vadd.f32 %v122, %v121
    %v124 = vsub.f32 %v123, 1.0
    %v125 = vmul.f32 %v124, 0.5
    %v126 = vmax.f32 %v125, -0.9999999
    %v127 = vmin.f32 %v126, 0.9999999
    %128 = vst [vmem:[#allocation7] sm:$0xff] %v127
    %v129 = vsub.f32 %v81, 1.0
    %v130 = vmul.f32 %v129, %v129
    %v131 = vadd.f32 %v130, 0.0
    %v132 = vmul.f32 %v86, %v86
    %v133 = vadd.f32 %v131, %v132
    %v134 = vmul.f32 %v91, %v91
    %v135 = vadd.f32 %v133, %v134
    %v136 = vmul.f32 %v96, %v96
    %v137 = vadd.f32 %v135, %v136
    %v138 = vsub.f32 %v101, 1.0
    %v139 = vmul.f32 %v138, %v138
    %v140 = vadd.f32 %v137, %v139
    %v141 = vmul.f32 %v106, %v106
    %v142 = vadd.f32 %v140, %v141
    %v143 = vmul.f32 %v111, %v111
    %v144 = vadd.f32 %v142, %v143
    %v145 = vmul.f32 %v116, %v116
    %v146 = vadd.f32 %v144, %v145
    %v147 = vsub.f32 %v121, 1.0
    %v148 = vmul.f32 %v147, %v147
    %v149 = vadd.f32 %v146, %v148
    %v150 = vrsqrt.pop %v149
    %v151 = vmul.f32 %v149, %v150
    %vm152 = vcmp.eq.f32.partialorder %v149, inf
    %v153 = vsel %vm152, %v149, %v151
    %vm154 = vcmp.eq.f32.partialorder %v149, 0.0
    %v155 = vand.u32 %v149, 2147483648
    %v156 = vsel %vm154, %v155, %v153
    %v157 = vlaneseq
    %v158 = vshrl.u32 %v157, 7
    %v159 = vlaneseq
    %v160 = vand.u32 %v159, 127
    %s161 = smul.u32 0, 8
    %v162 = vstv %s161
    %v163 = vadd.s32 %v162, %v158
    %v164 = vmul.u32 %v163, 128
    %v165 = vadd.s32 %v164, %v160
    %vm166 = vcmp.lt.s32.totalorder %v165, 8
    %v167 = vsel %vm166, %v156, 0.0
    %168 = vst [vmem:[#allocation8] sm:$0xff] %v167
    // Predicated region
    $region18: #{tpu_custom_call.1} parent=1 // pred_check
      _
    $region19: #{tpu_custom_call.1} parent=1 // pred_check_branch
      %170 = sbr.rel (0) target = $region21
    $region20: #{tpu_custom_call.1} parent=1 // pred_region
      %s172 = ssub.s32 128, 128
      %173 = vsyncadd [#allocation4], %s172
      %s175 = sshll.u32 [#allocation7], 4
      %s176 = int_to_ptr.vmem [resolvable:$true] %s175
      %178 = dma.vmem_to_hbm [thread:$0]  %s176, 128, %s2, [#allocation4]
    $region21: #{tpu_custom_call.1} parent=1 // pred_fallthru
      _
    // Predicated region
    $region22: #{tpu_custom_call.1} parent=1 // pred_check
      _
    $region23: #{tpu_custom_call.1} parent=1 // pred_check_branch
      %180 = sbr.rel (0) target = $region25
    $region24: #{tpu_custom_call.1} parent=1 // pred_region
      %s182 = ssub.s32 128, 128
      %183 = vsyncadd [#allocation9], %s182
      %s185 = sshll.u32 [#allocation8], 4
      %s186 = int_to_ptr.vmem [resolvable:$true] %s185
      %188 = dma.vmem_to_hbm [thread:$0]  %s186, 128, %s3, [#allocation9]
    $region25: #{tpu_custom_call.1} parent=1 // pred_fallthru
      _
    // Predicated region
    $region26: #{tpu_custom_call.1} parent=1 // pred_check
      _
    $region27: #{tpu_custom_call.1} parent=1 // pred_check_branch
      %190 = sbr.rel (0) target = $region29
    $region28: #{tpu_custom_call.1} parent=1 // pred_region
      %191 = dma.done [#allocation4], 128
    $region29: #{tpu_custom_call.1} parent=1 // pred_fallthru
      _
    // Predicated region
    $region30: #{tpu_custom_call.1} parent=1 // pred_check
      _
    $region31: #{tpu_custom_call.1} parent=1 // pred_check_branch
      %193 = sbr.rel (0) target = $region33
    $region32: #{tpu_custom_call.1} parent=1 // pred_region
      %194 = dma.done [#allocation9], 128
    $region33: #{tpu_custom_call.1} parent=1 // pred_fallthru
      _
    %195 = vsyncpa [#allocation3], 1
    %196 = vsyncpa [#allocation6], 1
    %197 = vsyncpa [#allocation4], 1
    %198 = vsyncpa [#allocation9], 1

</llo_original>
